<compile_context>
chip_gen: v7x
topology: tpu7x:2x2x1
jax: 0.10.0
libtpu: 0.0.40
codegen_flags: <defaults>
</compile_context>

<pallas_src>
import jax
import jax.numpy as jnp
from jax.experimental import pallas as pl
from jax.experimental.pallas import tpu as pltpu

_LANE = 128
_TILE_TARGET_BYTES = 2 * 1024 * 1024      # ~2 MiB per operand tile
_VMEM_LIMIT_BYTES = 32 * 1024 * 1024      # safe on v5e / v6e / v7x


def _ode_scalar_gamma_kernel(g_ref, y_ref, o_ref):
    # gamma is a single f32 word in SMEM; broadcast happens in-register.
    y = y_ref[...].astype(jnp.float32)
    g = g_ref[0]
    s = jnp.sin(y + g)
    o_ref[...] = (-y + s * s).astype(o_ref.dtype)


def _ode_bcast_gamma_kernel(y_ref, g_ref, o_ref):
    # Fallback when gamma is a full (broadcastable) tensor: stream it alongside y.
    y = y_ref[...].astype(jnp.float32)
    g = g_ref[...].astype(jnp.float32)
    s = jnp.sin(y + g)
    o_ref[...] = (-y + s * s).astype(o_ref.dtype)


def _layout(n):
    """Pick (padded_size, lane_width): widest 128-multiple last dim dividing n."""
    for w in (1024, 512, 256, 128):
        if n % w == 0:
            return n, w
    w = _LANE
    n_pad = ((n + w - 1) // w) * w
    return n_pad, w


def _pick_block_rows(rows, width, itemsize):
    """Large tile (~2 MiB/operand), rounded to the dtype's sublane granularity."""
    gran = max(8, 32 // max(1, itemsize))          # f32:8, bf16:16, int8:32
    target = max(gran, (_TILE_TARGET_BYTES // (width * itemsize)) // gran * gran)
    if rows <= target:
        block_rows = rows                           # full second-to-last dim (always legal)
        # Give v7x's 2 TensorCores something to split when the slab is big enough.
        if rows >= 2 * gran:
            block_rows = (((rows + 1) // 2) + gran - 1) // gran * gran
        return block_rows
    return target


def neural_ode_forward(t, y, gamma):
    """Pallas implementation of neuralODE.forward(t, y) with self.gamma = gamma."""
    del t  # unused in the reference forward
    orig_shape = y.shape
    orig_dtype = y.dtype
    gamma = jnp.asarray(gamma)

    n = y.size
    n_pad, width = _layout(n)
    needs_pad = n_pad != n
    rows = n_pad // width

    if needs_pad:
        y2d = jnp.pad(y.reshape(-1), (0, n_pad - n)).reshape(rows, width)
    else:
        y2d = y.reshape(rows, width)

    itemsize = jnp.dtype(orig_dtype).itemsize
    block_rows = _pick_block_rows(rows, width, itemsize)
    grid = (pl.cdiv(rows, block_rows),)

    cparams = pltpu.CompilerParams(
        dimension_semantics=("parallel",),
        vmem_limit_bytes=_VMEM_LIMIT_BYTES,
    )
    vmem_spec = pl.BlockSpec((block_rows, width), lambda i: (i, 0))

    if gamma.size == 1:
        # Scalar gamma: one f32 word in SMEM, no extra HBM stream.
        g_smem = jnp.reshape(gamma, (1,)).astype(jnp.float32)
        out2d = pl.pallas_call(
            _ode_scalar_gamma_kernel,
            out_shape=jax.ShapeDtypeStruct((rows, width), orig_dtype),
            grid=grid,
            in_specs=[
                pl.BlockSpec(memory_space=pltpu.MemorySpace.SMEM),
                vmem_spec,
            ],
            out_specs=vmem_spec,
            compiler_params=cparams,
        )(g_smem, y2d)
    else:
        # General broadcastable gamma: materialize and stream alongside y.
        g = jnp.broadcast_to(gamma.astype(orig_dtype), orig_shape)
        if needs_pad:
            g2d = jnp.pad(g.reshape(-1), (0, n_pad - n)).reshape(rows, width)
        else:
            g2d = g.reshape(rows, width)
        out2d = pl.pallas_call(
            _ode_bcast_gamma_kernel,
            out_shape=jax.ShapeDtypeStruct((rows, width), orig_dtype),
            grid=grid,
            in_specs=[vmem_spec, vmem_spec],
            out_specs=vmem_spec,
            compiler_params=cparams,
        )(y2d, g2d)

    if needs_pad:
        return out2d.reshape(-1)[:n].reshape(orig_shape)
    return out2d.reshape(orig_shape)


def neural_ode_reference(t, y, gamma):
    del t
    g = jnp.asarray(gamma, dtype=y.dtype)
    return -y + jnp.sin(y + g) ** 2


if __name__ == "__main__":
    key = jax.random.PRNGKey(0)
    k1, k2, k3, k4 = jax.random.split(key, 4)
    t = jnp.float32(0.0)  # unused by forward, kept for signature parity

    # (a) scalar gamma (typical fresh(gamma) usage), 1024-aligned size -> no pad, SMEM path.
    y_a = jax.random.normal(k1, (2, 4, 16, 16), dtype=jnp.float32)
    gamma_a = jnp.float32(0.37)
    out_a = jax.block_until_ready(neural_ode_forward(t, y_a, gamma_a))
    ref_a = neural_ode_reference(t, y_a, gamma_a)
    assert out_a.shape == y_a.shape and out_a.dtype == y_a.dtype
    assert jnp.allclose(out_a, ref_a, atol=1e-5, rtol=1e-5), "scalar-gamma mismatch"

    # (b) tensor gamma broadcastable to y -> streamed fallback path.
    y_b = jax.random.normal(k2, (2, 4, 16, 16), dtype=jnp.float32)
    gamma_b = jax.random.normal(k3, (2, 4, 16, 16), dtype=jnp.float32)
    out_b = jax.block_until_ready(neural_ode_forward(t, y_b, gamma_b))
    ref_b = neural_ode_reference(t, y_b, gamma_b)
    assert jnp.allclose(out_b, ref_b, atol=1e-5, rtol=1e-5), "tensor-gamma mismatch"

    # (c) awkward size -> exercises padded tail, partial last block, >=2 grid steps.
    y_c = jax.random.normal(k4, (2, 3, 33, 33), dtype=jnp.float32)
    out_c = jax.block_until_ready(neural_ode_forward(t, y_c, gamma_a))
    ref_c = neural_ode_reference(t, y_c, gamma_a)
    assert jnp.allclose(out_c, ref_c, atol=1e-5, rtol=1e-5), "padded-tail mismatch"

    print("KERNEL_OK")
</pallas_src>

<mosaic_0001>
module attributes {stable_mosaic.version = 11 : i64} {
  func.func @_ode_scalar_gamma_kernel(%arg0: i32, %arg1: memref<1xf32, #tpu.memory_space<smem>>, %arg2: memref<2x1024xf32, #tpu.memory_space<vmem>>, %arg3: memref<2x1024xf32, #tpu.memory_space<vmem>>) attributes {dimension_semantics = [#tpu.dimension_semantics<parallel>], iteration_bounds = array<i64: 1>, scalar_prefetch = 0 : i64, scratch_operands = 0 : i64, tpu.core_type = #tpu.core_type<tc>, window_params = [{transform_indices = @transform_0, window_bounds = array<i64: 1>}, {transform_indices = @transform_1, window_bounds = array<i64: 2, 1024>}, {transform_indices = @transform_2, window_bounds = array<i64: 2, 1024>}]} {
    %c0 = arith.constant 0 : index
    %c0_0 = arith.constant 0 : index
    %0 = vector.load %arg2[%c0, %c0_0] : memref<2x1024xf32, #tpu.memory_space<vmem>>, vector<2x1024xf32>
    %c0_1 = arith.constant 0 : index
    %1 = memref.load %arg1[%c0_1] : memref<1xf32, #tpu.memory_space<smem>>
    %2 = vector.broadcast %1 : f32 to vector<2x1024xf32>
    %3 = arith.addf %0, %2 : vector<2x1024xf32>
    %4 = math.sin %3 : vector<2x1024xf32>
    %cst = arith.constant 0.000000e+00 : f32
    %5 = vector.broadcast %cst : f32 to vector<2x1024xf32>
    %6 = arith.subf %5, %0 : vector<2x1024xf32>
    %7 = arith.mulf %4, %4 : vector<2x1024xf32>
    %8 = arith.addf %6, %7 : vector<2x1024xf32>
    %c0_2 = arith.constant 0 : index
    %c0_3 = arith.constant 0 : index
    %9 = vector.load %arg3[%c0_2, %c0_3] : memref<2x1024xf32, #tpu.memory_space<vmem>>, vector<2x1024xf32>
    tpu.vector_store %arg3[%c0_2, %c0_3], %8 {strides = array<i32>} : memref<2x1024xf32, #tpu.memory_space<vmem>>, vector<2x1024xf32>,
    return
  }
  func.func @transform_0(%arg0: i32) -> i32 {
    %c0_i32 = arith.constant 0 : i32
    %c0_i32_0 = arith.constant 0 : i32
    return %c0_i32 : i32
  }
  func.func @transform_1(%arg0: i32) -> (i32, i32) {
    %c0_i32 = arith.constant 0 : i32
    %c0_i32_0 = arith.constant 0 : i32
    return %arg0, %c0_i32 : i32, i32
  }
  func.func @transform_2(%arg0: i32) -> (i32, i32) {
    %c0_i32 = arith.constant 0 : i32
    %c0_i32_0 = arith.constant 0 : i32
    return %arg0, %c0_i32 : i32, i32
  }
}

</mosaic_0001>

<llo_original>
// kernel: tpu_custom_call.1
$region0: #{tpu_custom_call.1}
  #allocation0 [shape = 'u32[]', space=smem, size = 0x4, offset = 0x4, fixed_abs, tag = 'smem constant byte address 0x4 - core index']
  #allocation1 [shape = 'u32[144,128]{1,0:T(1,128)}', space=vmem, size = 0x12000, scoped, tag = 'internal scratch']
  #allocation2 [shape = 'f32[1]{0:T(128)S(6)}', space=smem, size = 0x200, scoped, tag = 'scoped memory for tpu_custom_call.1']
  %s0 = inlined_call_operand.<no memory space> [shape: f32[1], index: 0, kind: input, shape index: {}]
  %s1 = inlined_call_operand.hbm [shape: f32[2,1024], index: 1, kind: input, shape index: {}]
  %s2 = inlined_call_operand.hbm [shape: f32[2,1024], index: 2, kind: output, shape index: {}]
  %s3 = sld [smem:[#allocation0]]
  $region22: #{tpu_custom_call.1} parent=0
    _
  %s5 = ssub.s32 1, %s3
  %s6 = scalar_select 0, %s5, %s3
  %7 = sst [smem:[#allocation2]] %s0
  $region1: #{tpu_custom_call.1} parent=0
    #allocation3 [shape = 'u8[8192]{0}', space=vmem, size = 0x2000, scoped, tag = 'input window, operand 1, single buffered']
    #allocation4 [shape = 's32[1]{0}', space=sflag, size = 0x4, scoped, tag = 'scoped memory for tpu_custom_call.1']
    #allocation5 [shape = 's32[1]{0}', space=sflag, size = 0x4, scoped, tag = 'scoped memory for tpu_custom_call.1']
    #allocation6 [shape = 'u8[8192]{0}', space=vmem, size = 0x2000, scoped, tag = 'output window, operand 0, single buffered']
    %8 = vsyncpa [#allocation4], 0
    %9 = vsyncpa [#allocation5], 0
    // Predicated region
    $region2: #{tpu_custom_call.1} parent=1 // pred_check
      _
    $region3: #{tpu_custom_call.1} parent=1 // pred_check_branch
      %11 = sbr.rel (0) target = $region5
    $region4: #{tpu_custom_call.1} parent=1 // pred_region
      _
    $region5: #{tpu_custom_call.1} parent=1 // pred_fallthru
      _
    // Predicated region
    $region6: #{tpu_custom_call.1} parent=1 // pred_check
      _
    $region7: #{tpu_custom_call.1} parent=1 // pred_check_branch
      %13 = sbr.rel (0) target = $region9
    $region8: #{tpu_custom_call.1} parent=1 // pred_region
      %s15 = ssub.s32 256, 256
      %16 = vsyncadd [#allocation4], %s15
      %s18 = sshll.u32 [#allocation3], 4
      %s19 = int_to_ptr.vmem [resolvable:$true] %s18
      %21 = dma.hbm_to_vmem [thread:$0]  %s1, 256, %s19, [#allocation4]
    $region9: #{tpu_custom_call.1} parent=1 // pred_fallthru
      _
    // Predicated region
    $region10: #{tpu_custom_call.1} parent=1 // pred_check
      _
    $region11: #{tpu_custom_call.1} parent=1 // pred_check_branch
      %23 = sbr.rel (0) target = $region13
    $region12: #{tpu_custom_call.1} parent=1 // pred_region
      %24 = dma.done [#allocation4], 256
    $region13: #{tpu_custom_call.1} parent=1 // pred_fallthru
      _
    %v25 = vld [vmem:[#allocation3] sm:$0xff]
    %v26 = vld [vmem:[#allocation3 + $0x8] sm:$0xff]
    %s27 = sld [smem:[#allocation2]]
    %v28 = vstv %s27
    %v29 = vadd.f32 %v25, %v28
    %v30 = vadd.f32 %v26, %v28
    %v31 = vand.u32 2147483647, %v29
    %vm32 = vcmp.le.f32.partialorder %v31, 0.7853982
    %vm33 = vcmp.lt.s32.totalorder %v29, 0
    %v34 = vand.u32 %v29, 2139095040
    %v35 = vshrl.u32 %v34, 23
    %v36 = vsub.s32 %v35, 127
    %v37 = vand.u32 2147483647, %v29
    %v38 = vand.u32 %v37, 8388607
    %v39 = vor.u32 %v38, 8388608
    %v40 = vsub.s32 0, %v39
    %v41 = vadd.s32 %v36, 1
    %vm42 = vcmp.gt.s32.totalorder %v41, 0
    %v43 = vsel %vm42, %v41, 0
    %v44 = vshrl.u32 %v43, 5
    %v45 = vand.u32 %v43, 31
    %v46 = vsub.s32 32, %v45
    %v47 = vshrl.u32 683565275, %v46
    %v48 = vshll.u32 683565275, %v45
    %v49 = vshrl.u32 2475754826, %v46
    %v50 = vor.u32 %v48, %v49
    %v51 = vshll.u32 2475754826, %v45
    %v52 = vshrl.u32 2131351028, %v46
    %v53 = vor.u32 %v51, %v52
    %v54 = vshll.u32 2131351028, %v45
    %v55 = vshrl.u32 2102212464, %v46
    %v56 = vor.u32 %v54, %v55
    %v57 = vshll.u32 2102212464, %v45
    %v58 = vshrl.u32 920167782, %v46
    %v59 = vor.u32 %v57, %v58
    %v60 = vshll.u32 920167782, %v45
    %v61 = vshrl.u32 1326507024, %v46
    %v62 = vor.u32 %v60, %v61
    %vm63 = vcmp.lt.s32.totalorder %v44, 1
    %vm64 = vcmp.lt.s32.totalorder %v44, 2
    %vm65 = vcmp.lt.s32.totalorder %v44, 3
    %vm66 = vcmp.lt.s32.totalorder %v44, 4
    %v67 = vsel %vm63, %v47, %v50
    %v68 = vsel %vm66, %v56, 2102212464
    %v69 = vsel %vm65, %v53, %v68
    %v70 = vsel %vm64, %v67, %v69
    %v71 = vsel %vm63, %v50, %v53
    %v72 = vsel %vm66, %v59, 920167782
    %v73 = vsel %vm65, %v56, %v72
    %v74 = vsel %vm64, %v71, %v73
    %v75 = vsel %vm63, %v53, %v56
    %v76 = vsel %vm66, %v62, 1326507024
    %v77 = vsel %vm65, %v59, %v76
    %v78 = vsel %vm64, %v75, %v77
    %v79 = vshll.u32 %v39, 8
    %v80 = vmul.u32.u64.compose %v79, %v78
    %v81 = vextract.low.u32 %v80
    %v82 = vextract.high.u32 %v80
    %v83 = vmul.u32.u64.compose %v79, %v74
    %v84 = vextract.low.u32 %v83
    %v85 = vextract.high.u32 %v83
    %v86 = vmul.u32 %v79, %v70
    %v87 = vadd.s32 %v82, %v84
    %vm88 = vc.u32 %v82, %v84
    %v89 = vadd.s32 %v85, 1
    %v90 = vsel %vm88, %v89, %v85
    %v91 = vadd.s32 %v86, %v90
    %v92 = vadd.s32 %v91, 536870912
    %v93 = vshrl.u32 %v92, 30
    %v94 = vshll.u32 %v93, 30
    %v95 = vsub.s32 %v91, %v94
    %vm96 = vcmp.lt.s32.totalorder %v95, 0
    %v97 = vsub.s32 0, %v95
    %v98 = vsel %vm96, %v97, %v95
    %v99 = vclz %v98
    %v100 = vsub.s32 %v99, 2
    %vm101 = vcmp.gt.s32.totalorder 0, %v100
    %v102 = vsel %vm101, 0, %v100
    %v103 = vsub.s32 32, %v102
    %v104 = vshll.u32 %v95, %v102
    %v105 = vshrl.u32 %v87, %v103
    %v106 = vor.u32 %v104, %v105
    %v107 = vsub.s32 4294967266, %v102
    %v108 = vadd.s32 %v107, 127
    %v109 = vshll.u32 %v108, 23
    %v110 = vor.u32 4788187, %v109
    %v111 = vand.u32 2147483647, %v110
    %v113 = vcvt.s32.f32 %v106
    %v114 = vmul.f32 %v113, %v111
    %v115 = vxor.u32 %v114, 2147483648
    %v116 = vsel %vm33, %v115, %v114
    %v117 = vsub.s32 4, %v93
    %v118 = vsel %vm33, %v117, %v93
    %v119 = vsel %vm32, %v29, %v116
    %v120 = vsel %vm32, 0, %v118
    %v121 = vcosq.f32.pop %v119
    %v122 = vsinq.f32.pop %v119
    %vm123 = vweird.f32 %v29
    %v124 = vadd.s32 %v120, 3
    %v125 = vand.u32 %v124, 3
    %vm126 = vcmp.lt.s32.totalorder %v125, 2
    %vm127 = vcmp.eq.s32.totalorder %v125, 0
    %v128 = vxor.u32 %v122, 2147483648
    %v129 = vsel %vm127, %v121, %v128
    %vm130 = vcmp.eq.s32.totalorder %v125, 2
    %v131 = vxor.u32 %v121, 2147483648
    %v132 = vsel %vm130, %v131, %v122
    %v133 = vsel %vm126, %v129, %v132
    %v134 = vsel %vm123, nan, %v133
    %v135 = vand.u32 2147483647, %v30
    %vm136 = vcmp.le.f32.partialorder %v135, 0.7853982
    %vm137 = vcmp.lt.s32.totalorder %v30, 0
    %v138 = vand.u32 %v30, 2139095040
    %v139 = vshrl.u32 %v138, 23
    %v140 = vsub.s32 %v139, 127
    %v141 = vand.u32 2147483647, %v30
    %v142 = vand.u32 %v141, 8388607
    %v143 = vor.u32 %v142, 8388608
    %v144 = vsub.s32 0, %v143
    %v145 = vadd.s32 %v140, 1
    %vm146 = vcmp.gt.s32.totalorder %v145, 0
    %v147 = vsel %vm146, %v145, 0
    %v148 = vshrl.u32 %v147, 5
    %v149 = vand.u32 %v147, 31
    %v150 = vsub.s32 32, %v149
    %v151 = vshrl.u32 683565275, %v150
    %v152 = vshll.u32 683565275, %v149
    %v153 = vshrl.u32 2475754826, %v150
    %v154 = vor.u32 %v152, %v153
    %v155 = vshll.u32 2475754826, %v149
    %v156 = vshrl.u32 2131351028, %v150
    %v157 = vor.u32 %v155, %v156
    %v158 = vshll.u32 2131351028, %v149
    %v159 = vshrl.u32 2102212464, %v150
    %v160 = vor.u32 %v158, %v159
    %v161 = vshll.u32 2102212464, %v149
    %v162 = vshrl.u32 920167782, %v150
    %v163 = vor.u32 %v161, %v162
    %v164 = vshll.u32 920167782, %v149
    %v165 = vshrl.u32 1326507024, %v150
    %v166 = vor.u32 %v164, %v165
    %vm167 = vcmp.lt.s32.totalorder %v148, 1
    %vm168 = vcmp.lt.s32.totalorder %v148, 2
    %vm169 = vcmp.lt.s32.totalorder %v148, 3
    %vm170 = vcmp.lt.s32.totalorder %v148, 4
    %v171 = vsel %vm167, %v151, %v154
    %v172 = vsel %vm170, %v160, 2102212464
    %v173 = vsel %vm169, %v157, %v172
    %v174 = vsel %vm168, %v171, %v173
    %v175 = vsel %vm167, %v154, %v157
    %v176 = vsel %vm170, %v163, 920167782
    %v177 = vsel %vm169, %v160, %v176
    %v178 = vsel %vm168, %v175, %v177
    %v179 = vsel %vm167, %v157, %v160
    %v180 = vsel %vm170, %v166, 1326507024
    %v181 = vsel %vm169, %v163, %v180
    %v182 = vsel %vm168, %v179, %v181
    %v183 = vshll.u32 %v143, 8
    %v184 = vmul.u32.u64.compose %v183, %v182
    %v185 = vextract.low.u32 %v184
    %v186 = vextract.high.u32 %v184
    %v187 = vmul.u32.u64.compose %v183, %v178
    %v188 = vextract.low.u32 %v187
    %v189 = vextract.high.u32 %v187
    %v190 = vmul.u32 %v183, %v174
    %v191 = vadd.s32 %v186, %v188
    %vm192 = vc.u32 %v186, %v188
    %v193 = vadd.s32 %v189, 1
    %v194 = vsel %vm192, %v193, %v189
    %v195 = vadd.s32 %v190, %v194
    %v196 = vadd.s32 %v195, 536870912
    %v197 = vshrl.u32 %v196, 30
    %v198 = vshll.u32 %v197, 30
    %v199 = vsub.s32 %v195, %v198
    %vm200 = vcmp.lt.s32.totalorder %v199, 0
    %v201 = vsub.s32 0, %v199
    %v202 = vsel %vm200, %v201, %v199
    %v203 = vclz %v202
    %v204 = vsub.s32 %v203, 2
    %vm205 = vcmp.gt.s32.totalorder 0, %v204
    %v206 = vsel %vm205, 0, %v204
    %v207 = vsub.s32 32, %v206
    %v208 = vshll.u32 %v199, %v206
    %v209 = vshrl.u32 %v191, %v207
    %v210 = vor.u32 %v208, %v209
    %v211 = vsub.s32 4294967266, %v206
    %v212 = vadd.s32 %v211, 127
    %v213 = vshll.u32 %v212, 23
    %v214 = vor.u32 4788187, %v213
    %v215 = vand.u32 2147483647, %v214
    %v217 = vcvt.s32.f32 %v210
    %v218 = vmul.f32 %v217, %v215
    %v219 = vxor.u32 %v218, 2147483648
    %v220 = vsel %vm137, %v219, %v218
    %v221 = vsub.s32 4, %v197
    %v222 = vsel %vm137, %v221, %v197
    %v223 = vsel %vm136, %v30, %v220
    %v224 = vsel %vm136, 0, %v222
    %v225 = vcosq.f32.pop %v223
    %v226 = vsinq.f32.pop %v223
    %vm227 = vweird.f32 %v30
    %v228 = vadd.s32 %v224, 3
    %v229 = vand.u32 %v228, 3
    %vm230 = vcmp.lt.s32.totalorder %v229, 2
    %vm231 = vcmp.eq.s32.totalorder %v229, 0
    %v232 = vxor.u32 %v226, 2147483648
    %v233 = vsel %vm231, %v225, %v232
    %vm234 = vcmp.eq.s32.totalorder %v229, 2
    %v235 = vxor.u32 %v225, 2147483648
    %v236 = vsel %vm234, %v235, %v226
    %v237 = vsel %vm230, %v233, %v236
    %v238 = vsel %vm227, nan, %v237
    %v239 = vsub.f32 0.0, %v25
    %v240 = vsub.f32 0.0, %v26
    %v241 = vmul.f32 %v134, %v134
    %v242 = vmul.f32 %v238, %v238
    %v243 = vadd.f32 %v239, %v241
    %v244 = vadd.f32 %v240, %v242
    %245 = vst [vmem:[#allocation6] sm:$0xff] %v243
    %246 = vst [vmem:[#allocation6 + $0x8] sm:$0xff] %v244
    // Predicated region
    $region14: #{tpu_custom_call.1} parent=1 // pred_check
      _
    $region15: #{tpu_custom_call.1} parent=1 // pred_check_branch
      %248 = sbr.rel (0) target = $region17
    $region16: #{tpu_custom_call.1} parent=1 // pred_region
      %s250 = ssub.s32 256, 256
      %251 = vsyncadd [#allocation5], %s250
      %s253 = sshll.u32 [#allocation6], 4
      %s254 = int_to_ptr.vmem [resolvable:$true] %s253
      %256 = dma.vmem_to_hbm [thread:$0]  %s254, 256, %s2, [#allocation5]
    $region17: #{tpu_custom_call.1} parent=1 // pred_fallthru
      _
    // Predicated region
    $region18: #{tpu_custom_call.1} parent=1 // pred_check
      _
    $region19: #{tpu_custom_call.1} parent=1 // pred_check_branch
      %258 = sbr.rel (0) target = $region21
    $region20: #{tpu_custom_call.1} parent=1 // pred_region
      %259 = dma.done [#allocation5], 256
    $region21: #{tpu_custom_call.1} parent=1 // pred_fallthru
      _
    %260 = vsyncpa [#allocation4], 1
    %261 = vsyncpa [#allocation5], 1

</llo_original>
